<compile_context>
chip_gen: v7x
topology: tpu7x:2x2x1
jax: 0.10.0
libtpu: 0.0.40
codegen_flags: <defaults>
</compile_context>

<pallas_src>
import jax
import jax.numpy as jnp
from jax.experimental import pallas as pl
from jax.experimental.pallas import tpu as pltpu

# ---------------------------------------------------------------------------
# Packed-parameter layout (weights stored [out, in] row-major, PyTorch style)
# ---------------------------------------------------------------------------
N_IN, N_H, N_OUT = 3, 6, 4
W1_OFF = 0                      # w1: (6, 3)  -> w1[o, i] at W1_OFF + o*3 + i
B1_OFF = W1_OFF + N_H * N_IN    # b1: (6,)
W2_OFF = B1_OFF + N_H           # w2: (6, 6)
B2_OFF = W2_OFF + N_H * N_H     # b2: (6,)
W3_OFF = B2_OFF + N_H           # w3: (4, 6)
B3_OFF = W3_OFF + N_OUT * N_H   # b3: (4,)
N_PARAMS = B3_OFF + N_OUT       # = 94


def mlp_kernel(p_ref, x_ref, o_ref):
    """p_ref: [N_PARAMS] f32 in SMEM (packed w1,b1,w2,b2,w3,b3).
    x_ref: [3, SUB, LANE] f32 (feature-major, batch on sublanes x lanes).
    o_ref: [4, SUB, LANE] f32.
    """
    # Each feature row is a dense (SUB, LANE) slab -> full vreg utilization.
    x_rows = [x_ref[i] for i in range(N_IN)]

    def dense(rows, n_in, n_out, w_off, b_off, relu):
        outs = []
        for o in range(n_out):                      # fully unrolled: VPU only
            acc = rows[0] * p_ref[w_off + o * n_in]
            for i in range(1, n_in):
                acc = acc + rows[i] * p_ref[w_off + o * n_in + i]
            acc = acc + p_ref[b_off + o]
            outs.append(jnp.maximum(acc, 0.0) if relu else acc)
        return outs

    h1 = dense(x_rows, N_IN, N_H, W1_OFF, B1_OFF, relu=True)
    h2 = dense(h1, N_H, N_H, W2_OFF, B2_OFF, relu=True)
    h3 = dense(h2, N_H, N_OUT, W3_OFF, B3_OFF, relu=False)

    for o in range(N_OUT):                          # dense, lane-wide stores
        o_ref[o] = h3[o]


def _tile_dims(batch):
    """Pick a lane-dense (SUB sublane-rows) x (LANE lanes) batch tile."""
    lane = 512 if batch >= 4096 else 128
    rows_needed = max(1, -(-batch // lane))         # ceil(batch / lane)
    sub = min(256, -(-rows_needed // 8) * 8)        # multiple of 8, capped
    return lane, sub, rows_needed


def mlp_forward(x, packed_params):
    """x: [B, 3] float32; packed_params: [N_PARAMS] float32. Returns [B, 4]."""
    B = x.shape[0]
    lane, sub, rows_needed = _tile_dims(B)
    num_tiles = -(-rows_needed // sub)
    rows_padded = num_tiles * sub
    b_pad = rows_padded * lane

    # Pad batch, then re-layout: [B,3] -> [3, B_pad] -> [3, rows, LANE].
    # (Layout plumbing stays in the wrapper; the kernel only sees dense slabs.)
    xp = jnp.zeros((b_pad, N_IN), jnp.float32).at[:B].set(x.astype(jnp.float32))
    x_t = xp.T.reshape(N_IN, rows_padded, lane)

    out = pl.pallas_call(
        mlp_kernel,
        out_shape=jax.ShapeDtypeStruct((N_OUT, rows_padded, lane), jnp.float32),
        grid_spec=pl.GridSpec(
            grid=(num_tiles,),
            in_specs=[
                # Packed weights/biases: one small buffer, resident in SMEM.
                pl.BlockSpec(memory_space=pltpu.MemorySpace.SMEM),
                # Batch-tiled, lane-dense activation input.
                pl.BlockSpec((N_IN, sub, lane), lambda i: (0, i, 0)),
            ],
            out_specs=pl.BlockSpec((N_OUT, sub, lane), lambda i: (0, i, 0)),
        ),
        compiler_params=pltpu.CompilerParams(
            # Batch tiles are independent -> shard across TCs on v7x megacore.
            dimension_semantics=("parallel",),
        ),
    )(packed_params, x_t)

    # [4, rows, LANE] -> [4, B_pad] -> [B_pad, 4] -> strip padding.
    return out.reshape(N_OUT, b_pad).T[:B]


# ---------------------------------------------------------------------------
# Parameter init / packing / pure-JAX reference
# ---------------------------------------------------------------------------
def init_params(key):
    """PyTorch nn.Linear default init: U(-1/sqrt(fan_in), 1/sqrt(fan_in))."""
    def linear(k, fan_in, fan_out):
        kw, kb = jax.random.split(k)
        bound = fan_in ** -0.5
        w = jax.random.uniform(kw, (fan_out, fan_in), jnp.float32, -bound, bound)
        b = jax.random.uniform(kb, (fan_out,), jnp.float32, -bound, bound)
        return w, b

    k1, k2, k3 = jax.random.split(key, 3)
    w1, b1 = linear(k1, N_IN, N_H)
    w2, b2 = linear(k2, N_H, N_H)
    w3, b3 = linear(k3, N_H, N_OUT)
    return dict(w1=w1, b1=b1, w2=w2, b2=b2, w3=w3, b3=b3)


def pack_params(p):
    packed = jnp.concatenate([
        p["w1"].reshape(-1), p["b1"].reshape(-1),
        p["w2"].reshape(-1), p["b2"].reshape(-1),
        p["w3"].reshape(-1), p["b3"].reshape(-1),
    ]).astype(jnp.float32)
    assert packed.shape == (N_PARAMS,)
    return packed


def reference_forward(x, p):
    h1 = jnp.maximum(x @ p["w1"].T + p["b1"], 0.0)
    h2 = jnp.maximum(h1 @ p["w2"].T + p["b2"], 0.0)
    return h2 @ p["w3"].T + p["b3"]


if __name__ == "__main__":
    key = jax.random.PRNGKey(0)
    kp, kx = jax.random.split(key)
    params = init_params(kp)
    packed = pack_params(params)

    # Small deterministic inputs; second size exercises padding/tiling.
    for batch in (8, 1000):
        kxi = jax.random.fold_in(kx, batch)
        x = jax.random.normal(kxi, (batch, N_IN), jnp.float32)

        out = jax.block_until_ready(mlp_forward(x, packed))
        ref = reference_forward(x, params)

        assert out.shape == (batch, N_OUT), out.shape
        assert jnp.allclose(out, ref, atol=1e-5, rtol=1e-5), \
            f"mismatch vs JAX reference at batch={batch}"

    print("KERNEL_OK")
</pallas_src>

<mosaic_0001>
module attributes {stable_mosaic.version = 11 : i64} {
  func.func @mlp_kernel(%arg0: i32, %arg1: memref<94xf32, #tpu.memory_space<smem>>, %arg2: memref<3x8x128xf32, #tpu.memory_space<vmem>>, %arg3: memref<4x8x128xf32, #tpu.memory_space<vmem>>) attributes {dimension_semantics = [#tpu.dimension_semantics<parallel>], iteration_bounds = array<i64: 1>, scalar_prefetch = 0 : i64, scratch_operands = 0 : i64, tpu.core_type = #tpu.core_type<tc>, window_params = [{transform_indices = @transform_0, window_bounds = array<i64: 94>}, {transform_indices = @transform_1, window_bounds = array<i64: 3, 8, 128>}, {transform_indices = @transform_2, window_bounds = array<i64: 4, 8, 128>}]} {
    %c0 = arith.constant 0 : index
    %c0_0 = arith.constant 0 : index
    %c0_1 = arith.constant 0 : index
    %0 = vector.load %arg2[%c0, %c0_0, %c0_1] : memref<3x8x128xf32, #tpu.memory_space<vmem>>, vector<1x8x128xf32>
    %1 = vector.shape_cast %0 : vector<1x8x128xf32> to vector<8x128xf32>
    %c1 = arith.constant 1 : index
    %c0_2 = arith.constant 0 : index
    %c0_3 = arith.constant 0 : index
    %2 = vector.load %arg2[%c1, %c0_2, %c0_3] : memref<3x8x128xf32, #tpu.memory_space<vmem>>, vector<1x8x128xf32>
    %3 = vector.shape_cast %2 : vector<1x8x128xf32> to vector<8x128xf32>
    %c2 = arith.constant 2 : index
    %c0_4 = arith.constant 0 : index
    %c0_5 = arith.constant 0 : index
    %4 = vector.load %arg2[%c2, %c0_4, %c0_5] : memref<3x8x128xf32, #tpu.memory_space<vmem>>, vector<1x8x128xf32>
    %5 = vector.shape_cast %4 : vector<1x8x128xf32> to vector<8x128xf32>
    %c0_6 = arith.constant 0 : index
    %6 = memref.load %arg1[%c0_6] : memref<94xf32, #tpu.memory_space<smem>>
    %7 = vector.broadcast %6 : f32 to vector<8x128xf32>
    %8 = arith.mulf %1, %7 : vector<8x128xf32>
    %c1_7 = arith.constant 1 : index
    %9 = memref.load %arg1[%c1_7] : memref<94xf32, #tpu.memory_space<smem>>
    %10 = vector.broadcast %9 : f32 to vector<8x128xf32>
    %11 = arith.mulf %3, %10 : vector<8x128xf32>
    %12 = arith.addf %8, %11 : vector<8x128xf32>
    %c2_8 = arith.constant 2 : index
    %13 = memref.load %arg1[%c2_8] : memref<94xf32, #tpu.memory_space<smem>>
    %14 = vector.broadcast %13 : f32 to vector<8x128xf32>
    %15 = arith.mulf %5, %14 : vector<8x128xf32>
    %16 = arith.addf %12, %15 : vector<8x128xf32>
    %c18 = arith.constant 18 : index
    %17 = memref.load %arg1[%c18] : memref<94xf32, #tpu.memory_space<smem>>
    %18 = vector.broadcast %17 : f32 to vector<8x128xf32>
    %19 = arith.addf %16, %18 : vector<8x128xf32>
    %cst = arith.constant 0.000000e+00 : f32
    %20 = vector.broadcast %cst : f32 to vector<8x128xf32>
    %21 = arith.maximumf %19, %20 : vector<8x128xf32>
    %c3 = arith.constant 3 : index
    %22 = memref.load %arg1[%c3] : memref<94xf32, #tpu.memory_space<smem>>
    %23 = vector.broadcast %22 : f32 to vector<8x128xf32>
    %24 = arith.mulf %1, %23 : vector<8x128xf32>
    %c4 = arith.constant 4 : index
    %25 = memref.load %arg1[%c4] : memref<94xf32, #tpu.memory_space<smem>>
    %26 = vector.broadcast %25 : f32 to vector<8x128xf32>
    %27 = arith.mulf %3, %26 : vector<8x128xf32>
    %28 = arith.addf %24, %27 : vector<8x128xf32>
    %c5 = arith.constant 5 : index
    %29 = memref.load %arg1[%c5] : memref<94xf32, #tpu.memory_space<smem>>
    %30 = vector.broadcast %29 : f32 to vector<8x128xf32>
    %31 = arith.mulf %5, %30 : vector<8x128xf32>
    %32 = arith.addf %28, %31 : vector<8x128xf32>
    %c19 = arith.constant 19 : index
    %33 = memref.load %arg1[%c19] : memref<94xf32, #tpu.memory_space<smem>>
    %34 = vector.broadcast %33 : f32 to vector<8x128xf32>
    %35 = arith.addf %32, %34 : vector<8x128xf32>
    %cst_9 = arith.constant 0.000000e+00 : f32
    %36 = vector.broadcast %cst_9 : f32 to vector<8x128xf32>
    %37 = arith.maximumf %35, %36 : vector<8x128xf32>
    %c6 = arith.constant 6 : index
    %38 = memref.load %arg1[%c6] : memref<94xf32, #tpu.memory_space<smem>>
    %39 = vector.broadcast %38 : f32 to vector<8x128xf32>
    %40 = arith.mulf %1, %39 : vector<8x128xf32>
    %c7 = arith.constant 7 : index
    %41 = memref.load %arg1[%c7] : memref<94xf32, #tpu.memory_space<smem>>
    %42 = vector.broadcast %41 : f32 to vector<8x128xf32>
    %43 = arith.mulf %3, %42 : vector<8x128xf32>
    %44 = arith.addf %40, %43 : vector<8x128xf32>
    %c8 = arith.constant 8 : index
    %45 = memref.load %arg1[%c8] : memref<94xf32, #tpu.memory_space<smem>>
    %46 = vector.broadcast %45 : f32 to vector<8x128xf32>
    %47 = arith.mulf %5, %46 : vector<8x128xf32>
    %48 = arith.addf %44, %47 : vector<8x128xf32>
    %c20 = arith.constant 20 : index
    %49 = memref.load %arg1[%c20] : memref<94xf32, #tpu.memory_space<smem>>
    %50 = vector.broadcast %49 : f32 to vector<8x128xf32>
    %51 = arith.addf %48, %50 : vector<8x128xf32>
    %cst_10 = arith.constant 0.000000e+00 : f32
    %52 = vector.broadcast %cst_10 : f32 to vector<8x128xf32>
    %53 = arith.maximumf %51, %52 : vector<8x128xf32>
    %c9 = arith.constant 9 : index
    %54 = memref.load %arg1[%c9] : memref<94xf32, #tpu.memory_space<smem>>
    %55 = vector.broadcast %54 : f32 to vector<8x128xf32>
    %56 = arith.mulf %1, %55 : vector<8x128xf32>
    %c10 = arith.constant 10 : index
    %57 = memref.load %arg1[%c10] : memref<94xf32, #tpu.memory_space<smem>>
    %58 = vector.broadcast %57 : f32 to vector<8x128xf32>
    %59 = arith.mulf %3, %58 : vector<8x128xf32>
    %60 = arith.addf %56, %59 : vector<8x128xf32>
    %c11 = arith.constant 11 : index
    %61 = memref.load %arg1[%c11] : memref<94xf32, #tpu.memory_space<smem>>
    %62 = vector.broadcast %61 : f32 to vector<8x128xf32>
    %63 = arith.mulf %5, %62 : vector<8x128xf32>
    %64 = arith.addf %60, %63 : vector<8x128xf32>
    %c21 = arith.constant 21 : index
    %65 = memref.load %arg1[%c21] : memref<94xf32, #tpu.memory_space<smem>>
    %66 = vector.broadcast %65 : f32 to vector<8x128xf32>
    %67 = arith.addf %64, %66 : vector<8x128xf32>
    %cst_11 = arith.constant 0.000000e+00 : f32
    %68 = vector.broadcast %cst_11 : f32 to vector<8x128xf32>
    %69 = arith.maximumf %67, %68 : vector<8x128xf32>
    %c12 = arith.constant 12 : index
    %70 = memref.load %arg1[%c12] : memref<94xf32, #tpu.memory_space<smem>>
    %71 = vector.broadcast %70 : f32 to vector<8x128xf32>
    %72 = arith.mulf %1, %71 : vector<8x128xf32>
    %c13 = arith.constant 13 : index
    %73 = memref.load %arg1[%c13] : memref<94xf32, #tpu.memory_space<smem>>
    %74 = vector.broadcast %73 : f32 to vector<8x128xf32>
    %75 = arith.mulf %3, %74 : vector<8x128xf32>
    %76 = arith.addf %72, %75 : vector<8x128xf32>
    %c14 = arith.constant 14 : index
    %77 = memref.load %arg1[%c14] : memref<94xf32, #tpu.memory_space<smem>>
    %78 = vector.broadcast %77 : f32 to vector<8x128xf32>
    %79 = arith.mulf %5, %78 : vector<8x128xf32>
    %80 = arith.addf %76, %79 : vector<8x128xf32>
    %c22 = arith.constant 22 : index
    %81 = memref.load %arg1[%c22] : memref<94xf32, #tpu.memory_space<smem>>
    %82 = vector.broadcast %81 : f32 to vector<8x128xf32>
    %83 = arith.addf %80, %82 : vector<8x128xf32>
    %cst_12 = arith.constant 0.000000e+00 : f32
    %84 = vector.broadcast %cst_12 : f32 to vector<8x128xf32>
    %85 = arith.maximumf %83, %84 : vector<8x128xf32>
    %c15 = arith.constant 15 : index
    %86 = memref.load %arg1[%c15] : memref<94xf32, #tpu.memory_space<smem>>
    %87 = vector.broadcast %86 : f32 to vector<8x128xf32>
    %88 = arith.mulf %1, %87 : vector<8x128xf32>
    %c16 = arith.constant 16 : index
    %89 = memref.load %arg1[%c16] : memref<94xf32, #tpu.memory_space<smem>>
    %90 = vector.broadcast %89 : f32 to vector<8x128xf32>
    %91 = arith.mulf %3, %90 : vector<8x128xf32>
    %92 = arith.addf %88, %91 : vector<8x128xf32>
    %c17 = arith.constant 17 : index
    %93 = memref.load %arg1[%c17] : memref<94xf32, #tpu.memory_space<smem>>
    %94 = vector.broadcast %93 : f32 to vector<8x128xf32>
    %95 = arith.mulf %5, %94 : vector<8x128xf32>
    %96 = arith.addf %92, %95 : vector<8x128xf32>
    %c23 = arith.constant 23 : index
    %97 = memref.load %arg1[%c23] : memref<94xf32, #tpu.memory_space<smem>>
    %98 = vector.broadcast %97 : f32 to vector<8x128xf32>
    %99 = arith.addf %96, %98 : vector<8x128xf32>
    %cst_13 = arith.constant 0.000000e+00 : f32
    %100 = vector.broadcast %cst_13 : f32 to vector<8x128xf32>
    %101 = arith.maximumf %99, %100 : vector<8x128xf32>
    %c24 = arith.constant 24 : index
    %102 = memref.load %arg1[%c24] : memref<94xf32, #tpu.memory_space<smem>>
    %103 = vector.broadcast %102 : f32 to vector<8x128xf32>
    %104 = arith.mulf %21, %103 : vector<8x128xf32>
    %c25 = arith.constant 25 : index
    %105 = memref.load %arg1[%c25] : memref<94xf32, #tpu.memory_space<smem>>
    %106 = vector.broadcast %105 : f32 to vector<8x128xf32>
    %107 = arith.mulf %37, %106 : vector<8x128xf32>
    %108 = arith.addf %104, %107 : vector<8x128xf32>
    %c26 = arith.constant 26 : index
    %109 = memref.load %arg1[%c26] : memref<94xf32, #tpu.memory_space<smem>>
    %110 = vector.broadcast %109 : f32 to vector<8x128xf32>
    %111 = arith.mulf %53, %110 : vector<8x128xf32>
    %112 = arith.addf %108, %111 : vector<8x128xf32>
    %c27 = arith.constant 27 : index
    %113 = memref.load %arg1[%c27] : memref<94xf32, #tpu.memory_space<smem>>
    %114 = vector.broadcast %113 : f32 to vector<8x128xf32>
    %115 = arith.mulf %69, %114 : vector<8x128xf32>
    %116 = arith.addf %112, %115 : vector<8x128xf32>
    %c28 = arith.constant 28 : index
    %117 = memref.load %arg1[%c28] : memref<94xf32, #tpu.memory_space<smem>>
    %118 = vector.broadcast %117 : f32 to vector<8x128xf32>
    %119 = arith.mulf %85, %118 : vector<8x128xf32>
    %120 = arith.addf %116, %119 : vector<8x128xf32>
    %c29 = arith.constant 29 : index
    %121 = memref.load %arg1[%c29] : memref<94xf32, #tpu.memory_space<smem>>
    %122 = vector.broadcast %121 : f32 to vector<8x128xf32>
    %123 = arith.mulf %101, %122 : vector<8x128xf32>
    %124 = arith.addf %120, %123 : vector<8x128xf32>
    %c60 = arith.constant 60 : index
    %125 = memref.load %arg1[%c60] : memref<94xf32, #tpu.memory_space<smem>>
    %126 = vector.broadcast %125 : f32 to vector<8x128xf32>
    %127 = arith.addf %124, %126 : vector<8x128xf32>
    %cst_14 = arith.constant 0.000000e+00 : f32
    %128 = vector.broadcast %cst_14 : f32 to vector<8x128xf32>
    %129 = arith.maximumf %127, %128 : vector<8x128xf32>
    %c30 = arith.constant 30 : index
    %130 = memref.load %arg1[%c30] : memref<94xf32, #tpu.memory_space<smem>>
    %131 = vector.broadcast %130 : f32 to vector<8x128xf32>
    %132 = arith.mulf %21, %131 : vector<8x128xf32>
    %c31 = arith.constant 31 : index
    %133 = memref.load %arg1[%c31] : memref<94xf32, #tpu.memory_space<smem>>
    %134 = vector.broadcast %133 : f32 to vector<8x128xf32>
    %135 = arith.mulf %37, %134 : vector<8x128xf32>
    %136 = arith.addf %132, %135 : vector<8x128xf32>
    %c32 = arith.constant 32 : index
    %137 = memref.load %arg1[%c32] : memref<94xf32, #tpu.memory_space<smem>>
    %138 = vector.broadcast %137 : f32 to vector<8x128xf32>
    %139 = arith.mulf %53, %138 : vector<8x128xf32>
    %140 = arith.addf %136, %139 : vector<8x128xf32>
    %c33 = arith.constant 33 : index
    %141 = memref.load %arg1[%c33] : memref<94xf32, #tpu.memory_space<smem>>
    %142 = vector.broadcast %141 : f32 to vector<8x128xf32>
    %143 = arith.mulf %69, %142 : vector<8x128xf32>
    %144 = arith.addf %140, %143 : vector<8x128xf32>
    %c34 = arith.constant 34 : index
    %145 = memref.load %arg1[%c34] : memref<94xf32, #tpu.memory_space<smem>>
    %146 = vector.broadcast %145 : f32 to vector<8x128xf32>
    %147 = arith.mulf %85, %146 : vector<8x128xf32>
    %148 = arith.addf %144, %147 : vector<8x128xf32>
    %c35 = arith.constant 35 : index
    %149 = memref.load %arg1[%c35] : memref<94xf32, #tpu.memory_space<smem>>
    %150 = vector.broadcast %149 : f32 to vector<8x128xf32>
    %151 = arith.mulf %101, %150 : vector<8x128xf32>
    %152 = arith.addf %148, %151 : vector<8x128xf32>
    %c61 = arith.constant 61 : index
    %153 = memref.load %arg1[%c61] : memref<94xf32, #tpu.memory_space<smem>>
    %154 = vector.broadcast %153 : f32 to vector<8x128xf32>
    %155 = arith.addf %152, %154 : vector<8x128xf32>
    %cst_15 = arith.constant 0.000000e+00 : f32
    %156 = vector.broadcast %cst_15 : f32 to vector<8x128xf32>
    %157 = arith.maximumf %155, %156 : vector<8x128xf32>
    %c36 = arith.constant 36 : index
    %158 = memref.load %arg1[%c36] : memref<94xf32, #tpu.memory_space<smem>>
    %159 = vector.broadcast %158 : f32 to vector<8x128xf32>
    %160 = arith.mulf %21, %159 : vector<8x128xf32>
    %c37 = arith.constant 37 : index
    %161 = memref.load %arg1[%c37] : memref<94xf32, #tpu.memory_space<smem>>
    %162 = vector.broadcast %161 : f32 to vector<8x128xf32>
    %163 = arith.mulf %37, %162 : vector<8x128xf32>
    %164 = arith.addf %160, %163 : vector<8x128xf32>
    %c38 = arith.constant 38 : index
    %165 = memref.load %arg1[%c38] : memref<94xf32, #tpu.memory_space<smem>>
    %166 = vector.broadcast %165 : f32 to vector<8x128xf32>
    %167 = arith.mulf %53, %166 : vector<8x128xf32>
    %168 = arith.addf %164, %167 : vector<8x128xf32>
    %c39 = arith.constant 39 : index
    %169 = memref.load %arg1[%c39] : memref<94xf32, #tpu.memory_space<smem>>
    %170 = vector.broadcast %169 : f32 to vector<8x128xf32>
    %171 = arith.mulf %69, %170 : vector<8x128xf32>
    %172 = arith.addf %168, %171 : vector<8x128xf32>
    %c40 = arith.constant 40 : index
    %173 = memref.load %arg1[%c40] : memref<94xf32, #tpu.memory_space<smem>>
    %174 = vector.broadcast %173 : f32 to vector<8x128xf32>
    %175 = arith.mulf %85, %174 : vector<8x128xf32>
    %176 = arith.addf %172, %175 : vector<8x128xf32>
    %c41 = arith.constant 41 : index
    %177 = memref.load %arg1[%c41] : memref<94xf32, #tpu.memory_space<smem>>
    %178 = vector.broadcast %177 : f32 to vector<8x128xf32>
    %179 = arith.mulf %101, %178 : vector<8x128xf32>
    %180 = arith.addf %176, %179 : vector<8x128xf32>
    %c62 = arith.constant 62 : index
    %181 = memref.load %arg1[%c62] : memref<94xf32, #tpu.memory_space<smem>>
    %182 = vector.broadcast %181 : f32 to vector<8x128xf32>
    %183 = arith.addf %180, %182 : vector<8x128xf32>
    %cst_16 = arith.constant 0.000000e+00 : f32
    %184 = vector.broadcast %cst_16 : f32 to vector<8x128xf32>
    %185 = arith.maximumf %183, %184 : vector<8x128xf32>
    %c42 = arith.constant 42 : index
    %186 = memref.load %arg1[%c42] : memref<94xf32, #tpu.memory_space<smem>>
    %187 = vector.broadcast %186 : f32 to vector<8x128xf32>
    %188 = arith.mulf %21, %187 : vector<8x128xf32>
    %c43 = arith.constant 43 : index
    %189 = memref.load %arg1[%c43] : memref<94xf32, #tpu.memory_space<smem>>
    %190 = vector.broadcast %189 : f32 to vector<8x128xf32>
    %191 = arith.mulf %37, %190 : vector<8x128xf32>
    %192 = arith.addf %188, %191 : vector<8x128xf32>
    %c44 = arith.constant 44 : index
    %193 = memref.load %arg1[%c44] : memref<94xf32, #tpu.memory_space<smem>>
    %194 = vector.broadcast %193 : f32 to vector<8x128xf32>
    %195 = arith.mulf %53, %194 : vector<8x128xf32>
    %196 = arith.addf %192, %195 : vector<8x128xf32>
    %c45 = arith.constant 45 : index
    %197 = memref.load %arg1[%c45] : memref<94xf32, #tpu.memory_space<smem>>
    %198 = vector.broadcast %197 : f32 to vector<8x128xf32>
    %199 = arith.mulf %69, %198 : vector<8x128xf32>
    %200 = arith.addf %196, %199 : vector<8x128xf32>
    %c46 = arith.constant 46 : index
    %201 = memref.load %arg1[%c46] : memref<94xf32, #tpu.memory_space<smem>>
    %202 = vector.broadcast %201 : f32 to vector<8x128xf32>
    %203 = arith.mulf %85, %202 : vector<8x128xf32>
    %204 = arith.addf %200, %203 : vector<8x128xf32>
    %c47 = arith.constant 47 : index
    %205 = memref.load %arg1[%c47] : memref<94xf32, #tpu.memory_space<smem>>
    %206 = vector.broadcast %205 : f32 to vector<8x128xf32>
    %207 = arith.mulf %101, %206 : vector<8x128xf32>
    %208 = arith.addf %204, %207 : vector<8x128xf32>
    %c63 = arith.constant 63 : index
    %209 = memref.load %arg1[%c63] : memref<94xf32, #tpu.memory_space<smem>>
    %210 = vector.broadcast %209 : f32 to vector<8x128xf32>
    %211 = arith.addf %208, %210 : vector<8x128xf32>
    %cst_17 = arith.constant 0.000000e+00 : f32
    %212 = vector.broadcast %cst_17 : f32 to vector<8x128xf32>
    %213 = arith.maximumf %211, %212 : vector<8x128xf32>
    %c48 = arith.constant 48 : index
    %214 = memref.load %arg1[%c48] : memref<94xf32, #tpu.memory_space<smem>>
    %215 = vector.broadcast %214 : f32 to vector<8x128xf32>
    %216 = arith.mulf %21, %215 : vector<8x128xf32>
    %c49 = arith.constant 49 : index
    %217 = memref.load %arg1[%c49] : memref<94xf32, #tpu.memory_space<smem>>
    %218 = vector.broadcast %217 : f32 to vector<8x128xf32>
    %219 = arith.mulf %37, %218 : vector<8x128xf32>
    %220 = arith.addf %216, %219 : vector<8x128xf32>
    %c50 = arith.constant 50 : index
    %221 = memref.load %arg1[%c50] : memref<94xf32, #tpu.memory_space<smem>>
    %222 = vector.broadcast %221 : f32 to vector<8x128xf32>
    %223 = arith.mulf %53, %222 : vector<8x128xf32>
    %224 = arith.addf %220, %223 : vector<8x128xf32>
    %c51 = arith.constant 51 : index
    %225 = memref.load %arg1[%c51] : memref<94xf32, #tpu.memory_space<smem>>
    %226 = vector.broadcast %225 : f32 to vector<8x128xf32>
    %227 = arith.mulf %69, %226 : vector<8x128xf32>
    %228 = arith.addf %224, %227 : vector<8x128xf32>
    %c52 = arith.constant 52 : index
    %229 = memref.load %arg1[%c52] : memref<94xf32, #tpu.memory_space<smem>>
    %230 = vector.broadcast %229 : f32 to vector<8x128xf32>
    %231 = arith.mulf %85, %230 : vector<8x128xf32>
    %232 = arith.addf %228, %231 : vector<8x128xf32>
    %c53 = arith.constant 53 : index
    %233 = memref.load %arg1[%c53] : memref<94xf32, #tpu.memory_space<smem>>
    %234 = vector.broadcast %233 : f32 to vector<8x128xf32>
    %235 = arith.mulf %101, %234 : vector<8x128xf32>
    %236 = arith.addf %232, %235 : vector<8x128xf32>
    %c64 = arith.constant 64 : index
    %237 = memref.load %arg1[%c64] : memref<94xf32, #tpu.memory_space<smem>>
    %238 = vector.broadcast %237 : f32 to vector<8x128xf32>
    %239 = arith.addf %236, %238 : vector<8x128xf32>
    %cst_18 = arith.constant 0.000000e+00 : f32
    %240 = vector.broadcast %cst_18 : f32 to vector<8x128xf32>
    %241 = arith.maximumf %239, %240 : vector<8x128xf32>
    %c54 = arith.constant 54 : index
    %242 = memref.load %arg1[%c54] : memref<94xf32, #tpu.memory_space<smem>>
    %243 = vector.broadcast %242 : f32 to vector<8x128xf32>
    %244 = arith.mulf %21, %243 : vector<8x128xf32>
    %c55 = arith.constant 55 : index
    %245 = memref.load %arg1[%c55] : memref<94xf32, #tpu.memory_space<smem>>
    %246 = vector.broadcast %245 : f32 to vector<8x128xf32>
    %247 = arith.mulf %37, %246 : vector<8x128xf32>
    %248 = arith.addf %244, %247 : vector<8x128xf32>
    %c56 = arith.constant 56 : index
    %249 = memref.load %arg1[%c56] : memref<94xf32, #tpu.memory_space<smem>>
    %250 = vector.broadcast %249 : f32 to vector<8x128xf32>
    %251 = arith.mulf %53, %250 : vector<8x128xf32>
    %252 = arith.addf %248, %251 : vector<8x128xf32>
    %c57 = arith.constant 57 : index
    %253 = memref.load %arg1[%c57] : memref<94xf32, #tpu.memory_space<smem>>
    %254 = vector.broadcast %253 : f32 to vector<8x128xf32>
    %255 = arith.mulf %69, %254 : vector<8x128xf32>
    %256 = arith.addf %252, %255 : vector<8x128xf32>
    %c58 = arith.constant 58 : index
    %257 = memref.load %arg1[%c58] : memref<94xf32, #tpu.memory_space<smem>>
    %258 = vector.broadcast %257 : f32 to vector<8x128xf32>
    %259 = arith.mulf %85, %258 : vector<8x128xf32>
    %260 = arith.addf %256, %259 : vector<8x128xf32>
    %c59 = arith.constant 59 : index
    %261 = memref.load %arg1[%c59] : memref<94xf32, #tpu.memory_space<smem>>
    %262 = vector.broadcast %261 : f32 to vector<8x128xf32>
    %263 = arith.mulf %101, %262 : vector<8x128xf32>
    %264 = arith.addf %260, %263 : vector<8x128xf32>
    %c65 = arith.constant 65 : index
    %265 = memref.load %arg1[%c65] : memref<94xf32, #tpu.memory_space<smem>>
    %266 = vector.broadcast %265 : f32 to vector<8x128xf32>
    %267 = arith.addf %264, %266 : vector<8x128xf32>
    %cst_19 = arith.constant 0.000000e+00 : f32
    %268 = vector.broadcast %cst_19 : f32 to vector<8x128xf32>
    %269 = arith.maximumf %267, %268 : vector<8x128xf32>
    %c66 = arith.constant 66 : index
    %270 = memref.load %arg1[%c66] : memref<94xf32, #tpu.memory_space<smem>>
    %271 = vector.broadcast %270 : f32 to vector<8x128xf32>
    %272 = arith.mulf %129, %271 : vector<8x128xf32>
    %c67 = arith.constant 67 : index
    %273 = memref.load %arg1[%c67] : memref<94xf32, #tpu.memory_space<smem>>
    %274 = vector.broadcast %273 : f32 to vector<8x128xf32>
    %275 = arith.mulf %157, %274 : vector<8x128xf32>
    %276 = arith.addf %272, %275 : vector<8x128xf32>
    %c68 = arith.constant 68 : index
    %277 = memref.load %arg1[%c68] : memref<94xf32, #tpu.memory_space<smem>>
    %278 = vector.broadcast %277 : f32 to vector<8x128xf32>
    %279 = arith.mulf %185, %278 : vector<8x128xf32>
    %280 = arith.addf %276, %279 : vector<8x128xf32>
    %c69 = arith.constant 69 : index
    %281 = memref.load %arg1[%c69] : memref<94xf32, #tpu.memory_space<smem>>
    %282 = vector.broadcast %281 : f32 to vector<8x128xf32>
    %283 = arith.mulf %213, %282 : vector<8x128xf32>
    %284 = arith.addf %280, %283 : vector<8x128xf32>
    %c70 = arith.constant 70 : index
    %285 = memref.load %arg1[%c70] : memref<94xf32, #tpu.memory_space<smem>>
    %286 = vector.broadcast %285 : f32 to vector<8x128xf32>
    %287 = arith.mulf %241, %286 : vector<8x128xf32>
    %288 = arith.addf %284, %287 : vector<8x128xf32>
    %c71 = arith.constant 71 : index
    %289 = memref.load %arg1[%c71] : memref<94xf32, #tpu.memory_space<smem>>
    %290 = vector.broadcast %289 : f32 to vector<8x128xf32>
    %291 = arith.mulf %269, %290 : vector<8x128xf32>
    %292 = arith.addf %288, %291 : vector<8x128xf32>
    %c90 = arith.constant 90 : index
    %293 = memref.load %arg1[%c90] : memref<94xf32, #tpu.memory_space<smem>>
    %294 = vector.broadcast %293 : f32 to vector<8x128xf32>
    %295 = arith.addf %292, %294 : vector<8x128xf32>
    %c72 = arith.constant 72 : index
    %296 = memref.load %arg1[%c72] : memref<94xf32, #tpu.memory_space<smem>>
    %297 = vector.broadcast %296 : f32 to vector<8x128xf32>
    %298 = arith.mulf %129, %297 : vector<8x128xf32>
    %c73 = arith.constant 73 : index
    %299 = memref.load %arg1[%c73] : memref<94xf32, #tpu.memory_space<smem>>
    %300 = vector.broadcast %299 : f32 to vector<8x128xf32>
    %301 = arith.mulf %157, %300 : vector<8x128xf32>
    %302 = arith.addf %298, %301 : vector<8x128xf32>
    %c74 = arith.constant 74 : index
    %303 = memref.load %arg1[%c74] : memref<94xf32, #tpu.memory_space<smem>>
    %304 = vector.broadcast %303 : f32 to vector<8x128xf32>
    %305 = arith.mulf %185, %304 : vector<8x128xf32>
    %306 = arith.addf %302, %305 : vector<8x128xf32>
    %c75 = arith.constant 75 : index
    %307 = memref.load %arg1[%c75] : memref<94xf32, #tpu.memory_space<smem>>
    %308 = vector.broadcast %307 : f32 to vector<8x128xf32>
    %309 = arith.mulf %213, %308 : vector<8x128xf32>
    %310 = arith.addf %306, %309 : vector<8x128xf32>
    %c76 = arith.constant 76 : index
    %311 = memref.load %arg1[%c76] : memref<94xf32, #tpu.memory_space<smem>>
    %312 = vector.broadcast %311 : f32 to vector<8x128xf32>
    %313 = arith.mulf %241, %312 : vector<8x128xf32>
    %314 = arith.addf %310, %313 : vector<8x128xf32>
    %c77 = arith.constant 77 : index
    %315 = memref.load %arg1[%c77] : memref<94xf32, #tpu.memory_space<smem>>
    %316 = vector.broadcast %315 : f32 to vector<8x128xf32>
    %317 = arith.mulf %269, %316 : vector<8x128xf32>
    %318 = arith.addf %314, %317 : vector<8x128xf32>
    %c91 = arith.constant 91 : index
    %319 = memref.load %arg1[%c91] : memref<94xf32, #tpu.memory_space<smem>>
    %320 = vector.broadcast %319 : f32 to vector<8x128xf32>
    %321 = arith.addf %318, %320 : vector<8x128xf32>
    %c78 = arith.constant 78 : index
    %322 = memref.load %arg1[%c78] : memref<94xf32, #tpu.memory_space<smem>>
    %323 = vector.broadcast %322 : f32 to vector<8x128xf32>
    %324 = arith.mulf %129, %323 : vector<8x128xf32>
    %c79 = arith.constant 79 : index
    %325 = memref.load %arg1[%c79] : memref<94xf32, #tpu.memory_space<smem>>
    %326 = vector.broadcast %325 : f32 to vector<8x128xf32>
    %327 = arith.mulf %157, %326 : vector<8x128xf32>
    %328 = arith.addf %324, %327 : vector<8x128xf32>
    %c80 = arith.constant 80 : index
    %329 = memref.load %arg1[%c80] : memref<94xf32, #tpu.memory_space<smem>>
    %330 = vector.broadcast %329 : f32 to vector<8x128xf32>
    %331 = arith.mulf %185, %330 : vector<8x128xf32>
    %332 = arith.addf %328, %331 : vector<8x128xf32>
    %c81 = arith.constant 81 : index
    %333 = memref.load %arg1[%c81] : memref<94xf32, #tpu.memory_space<smem>>
    %334 = vector.broadcast %333 : f32 to vector<8x128xf32>
    %335 = arith.mulf %213, %334 : vector<8x128xf32>
    %336 = arith.addf %332, %335 : vector<8x128xf32>
    %c82 = arith.constant 82 : index
    %337 = memref.load %arg1[%c82] : memref<94xf32, #tpu.memory_space<smem>>
    %338 = vector.broadcast %337 : f32 to vector<8x128xf32>
    %339 = arith.mulf %241, %338 : vector<8x128xf32>
    %340 = arith.addf %336, %339 : vector<8x128xf32>
    %c83 = arith.constant 83 : index
    %341 = memref.load %arg1[%c83] : memref<94xf32, #tpu.memory_space<smem>>
    %342 = vector.broadcast %341 : f32 to vector<8x128xf32>
    %343 = arith.mulf %269, %342 : vector<8x128xf32>
    %344 = arith.addf %340, %343 : vector<8x128xf32>
    %c92 = arith.constant 92 : index
    %345 = memref.load %arg1[%c92] : memref<94xf32, #tpu.memory_space<smem>>
    %346 = vector.broadcast %345 : f32 to vector<8x128xf32>
    %347 = arith.addf %344, %346 : vector<8x128xf32>
    %c84 = arith.constant 84 : index
    %348 = memref.load %arg1[%c84] : memref<94xf32, #tpu.memory_space<smem>>
    %349 = vector.broadcast %348 : f32 to vector<8x128xf32>
    %350 = arith.mulf %129, %349 : vector<8x128xf32>
    %c85 = arith.constant 85 : index
    %351 = memref.load %arg1[%c85] : memref<94xf32, #tpu.memory_space<smem>>
    %352 = vector.broadcast %351 : f32 to vector<8x128xf32>
    %353 = arith.mulf %157, %352 : vector<8x128xf32>
    %354 = arith.addf %350, %353 : vector<8x128xf32>
    %c86 = arith.constant 86 : index
    %355 = memref.load %arg1[%c86] : memref<94xf32, #tpu.memory_space<smem>>
    %356 = vector.broadcast %355 : f32 to vector<8x128xf32>
    %357 = arith.mulf %185, %356 : vector<8x128xf32>
    %358 = arith.addf %354, %357 : vector<8x128xf32>
    %c87 = arith.constant 87 : index
    %359 = memref.load %arg1[%c87] : memref<94xf32, #tpu.memory_space<smem>>
    %360 = vector.broadcast %359 : f32 to vector<8x128xf32>
    %361 = arith.mulf %213, %360 : vector<8x128xf32>
    %362 = arith.addf %358, %361 : vector<8x128xf32>
    %c88 = arith.constant 88 : index
    %363 = memref.load %arg1[%c88] : memref<94xf32, #tpu.memory_space<smem>>
    %364 = vector.broadcast %363 : f32 to vector<8x128xf32>
    %365 = arith.mulf %241, %364 : vector<8x128xf32>
    %366 = arith.addf %362, %365 : vector<8x128xf32>
    %c89 = arith.constant 89 : index
    %367 = memref.load %arg1[%c89] : memref<94xf32, #tpu.memory_space<smem>>
    %368 = vector.broadcast %367 : f32 to vector<8x128xf32>
    %369 = arith.mulf %269, %368 : vector<8x128xf32>
    %370 = arith.addf %366, %369 : vector<8x128xf32>
    %c93 = arith.constant 93 : index
    %371 = memref.load %arg1[%c93] : memref<94xf32, #tpu.memory_space<smem>>
    %372 = vector.broadcast %371 : f32 to vector<8x128xf32>
    %373 = arith.addf %370, %372 : vector<8x128xf32>
    %c0_20 = arith.constant 0 : index
    %c0_21 = arith.constant 0 : index
    %c0_22 = arith.constant 0 : index
    %374 = vector.load %arg3[%c0_20, %c0_21, %c0_22] : memref<4x8x128xf32, #tpu.memory_space<vmem>>, vector<1x8x128xf32>
    %375 = vector.shape_cast %374 : vector<1x8x128xf32> to vector<8x128xf32>
    %376 = vector.shape_cast %295 : vector<8x128xf32> to vector<1x8x128xf32>
    tpu.vector_store %arg3[%c0_20, %c0_21, %c0_22], %376 {strides = array<i32>} : memref<4x8x128xf32, #tpu.memory_space<vmem>>, vector<1x8x128xf32>,
    %c1_23 = arith.constant 1 : index
    %c0_24 = arith.constant 0 : index
    %c0_25 = arith.constant 0 : index
    %377 = vector.load %arg3[%c1_23, %c0_24, %c0_25] : memref<4x8x128xf32, #tpu.memory_space<vmem>>, vector<1x8x128xf32>
    %378 = vector.shape_cast %377 : vector<1x8x128xf32> to vector<8x128xf32>
    %379 = vector.shape_cast %321 : vector<8x128xf32> to vector<1x8x128xf32>
    tpu.vector_store %arg3[%c1_23, %c0_24, %c0_25], %379 {strides = array<i32>} : memref<4x8x128xf32, #tpu.memory_space<vmem>>, vector<1x8x128xf32>,
    %c2_26 = arith.constant 2 : index
    %c0_27 = arith.constant 0 : index
    %c0_28 = arith.constant 0 : index
    %380 = vector.load %arg3[%c2_26, %c0_27, %c0_28] : memref<4x8x128xf32, #tpu.memory_space<vmem>>, vector<1x8x128xf32>
    %381 = vector.shape_cast %380 : vector<1x8x128xf32> to vector<8x128xf32>
    %382 = vector.shape_cast %347 : vector<8x128xf32> to vector<1x8x128xf32>
    tpu.vector_store %arg3[%c2_26, %c0_27, %c0_28], %382 {strides = array<i32>} : memref<4x8x128xf32, #tpu.memory_space<vmem>>, vector<1x8x128xf32>,
    %c3_29 = arith.constant 3 : index
    %c0_30 = arith.constant 0 : index
    %c0_31 = arith.constant 0 : index
    %383 = vector.load %arg3[%c3_29, %c0_30, %c0_31] : memref<4x8x128xf32, #tpu.memory_space<vmem>>, vector<1x8x128xf32>
    %384 = vector.shape_cast %383 : vector<1x8x128xf32> to vector<8x128xf32>
    %385 = vector.shape_cast %373 : vector<8x128xf32> to vector<1x8x128xf32>
    tpu.vector_store %arg3[%c3_29, %c0_30, %c0_31], %385 {strides = array<i32>} : memref<4x8x128xf32, #tpu.memory_space<vmem>>, vector<1x8x128xf32>,
    return
  }
  func.func @transform_0(%arg0: i32) -> i32 {
    %c0_i32 = arith.constant 0 : i32
    %c0_i32_0 = arith.constant 0 : i32
    return %c0_i32 : i32
  }
  func.func @transform_1(%arg0: i32) -> (i32, i32, i32) {
    %c0_i32 = arith.constant 0 : i32
    %c0_i32_0 = arith.constant 0 : i32
    %c0_i32_1 = arith.constant 0 : i32
    return %c0_i32, %arg0, %c0_i32_0 : i32, i32, i32
  }
  func.func @transform_2(%arg0: i32) -> (i32, i32, i32) {
    %c0_i32 = arith.constant 0 : i32
    %c0_i32_0 = arith.constant 0 : i32
    %c0_i32_1 = arith.constant 0 : i32
    return %c0_i32, %arg0, %c0_i32_0 : i32, i32, i32
  }
}

</mosaic_0001>

<llo_original>
// kernel: tpu_custom_call.1
$region0: #{tpu_custom_call.1}
  #allocation0 [shape = 'u32[]', space=smem, size = 0x4, offset = 0x4, fixed_abs, tag = 'smem constant byte address 0x4 - core index']
  #allocation1 [shape = 'u32[144,128]{1,0:T(1,128)}', space=vmem, size = 0x12000, scoped, tag = 'internal scratch']
  %s0 = inlined_call_operand.hbm [shape: f32[94], index: 0, kind: input, shape index: {}]
  %s1 = inlined_call_operand.hbm [shape: f32[3,8,128], index: 1, kind: input, shape index: {}]
  %s2 = inlined_call_operand.hbm [shape: f32[4,8,128], index: 2, kind: output, shape index: {}]
  %s3 = sld [smem:[#allocation0]]
  $region26: #{tpu_custom_call.1} parent=0
    _
  %s5 = ssub.s32 1, %s3
  %s6 = scalar_select 0, %s5, %s3
  $region1: #{tpu_custom_call.1} parent=0
    #allocation2 [shape = 'u8[512]{0}', space=smem, size = 0x200, scoped, tag = 'input window, operand 0, single buffered']
    #allocation3 [shape = 's32[1]{0}', space=sflag, size = 0x4, scoped, tag = 'scoped memory for tpu_custom_call.1']
    #allocation4 [shape = 's32[1]{0}', space=sflag, size = 0x4, scoped, tag = 'scoped memory for tpu_custom_call.1']
    #allocation5 [shape = 's32[1]{0}', space=sflag, size = 0x4, scoped, tag = 'scoped memory for tpu_custom_call.1']
    #allocation6 [shape = 'u8[12288]{0}', space=vmem, size = 0x3000, scoped, tag = 'input window, operand 1, single buffered']
    #allocation7 [shape = 'u8[16384]{0}', space=vmem, size = 0x4000, scoped, tag = 'output window, operand 0, single buffered']
    %7 = vsyncpa [#allocation5], 0
    %8 = vsyncpa [#allocation3], 0
    %9 = vsyncpa [#allocation4], 0
    // Predicated region
    $region2: #{tpu_custom_call.1} parent=1 // pred_check
      _
    $region3: #{tpu_custom_call.1} parent=1 // pred_check_branch
      %11 = sbr.rel (0) target = $region5
    $region4: #{tpu_custom_call.1} parent=1 // pred_region
      %s13 = ssub.s32 16, 16
      %14 = vsyncadd [#allocation5], %s13
      %17 = dma.hbm_to_smem %s0, 16, [#allocation2], [#allocation5]
    $region5: #{tpu_custom_call.1} parent=1 // pred_fallthru
      _
    // Predicated region
    $region6: #{tpu_custom_call.1} parent=1 // pred_check
      _
    $region7: #{tpu_custom_call.1} parent=1 // pred_check_branch
      %19 = sbr.rel (0) target = $region9
    $region8: #{tpu_custom_call.1} parent=1 // pred_region
      %s21 = ssub.s32 384, 384
      %22 = vsyncadd [#allocation3], %s21
      %s23 = sshll.u32 [#allocation6], 4
      %s24 = int_to_ptr.vmem [resolvable:$true] %s23
      %29 = dma.hbm_to_vmem [thread:$0]  %s1, 384, %s24, [#allocation3], 128, 128, 8
    $region9: #{tpu_custom_call.1} parent=1 // pred_fallthru
      _
    // Predicated region
    $region10: #{tpu_custom_call.1} parent=1 // pred_check
      _
    $region11: #{tpu_custom_call.1} parent=1 // pred_check_branch
      %31 = sbr.rel (0) target = $region13
    $region12: #{tpu_custom_call.1} parent=1 // pred_region
      %32 = dma.done [#allocation5], 16
    $region13: #{tpu_custom_call.1} parent=1 // pred_fallthru
      _
    // Predicated region
    $region14: #{tpu_custom_call.1} parent=1 // pred_check
      _
    $region15: #{tpu_custom_call.1} parent=1 // pred_check_branch
      %34 = sbr.rel (0) target = $region17
    $region16: #{tpu_custom_call.1} parent=1 // pred_region
      %35 = dma.done [#allocation3], 384
    $region17: #{tpu_custom_call.1} parent=1 // pred_fallthru
      _
    %36 = sfence
    %v37 = vld [vmem:[#allocation6] sm:$0xff]
    %s38 = scalar_lea.vmem [#allocation6], 8
    %v39 = vld [vmem:[%s38] sm:$0xff]
    %s40 = scalar_lea.vmem [#allocation6], 16
    %v41 = vld [vmem:[%s40] sm:$0xff]
    %s42 = sld [smem:[#allocation2]]
    %v43 = vstv %s42
    %v44 = vmul.f32 %v37, %v43
    %s45 = sld [smem:[#allocation2 + $0x1]]
    %v46 = vstv %s45
    %v47 = vmul.f32 %v39, %v46
    %v48 = vadd.f32 %v44, %v47
    %s49 = sld [smem:[#allocation2 + $0x2]]
    %v50 = vstv %s49
    %v51 = vmul.f32 %v41, %v50
    %v52 = vadd.f32 %v48, %v51
    %s53 = sld [smem:[#allocation2 + $0x12]]
    %v54 = vstv %s53
    %v55 = vadd.f32 %v52, %v54
    %v56 = vmax.f32 %v55, 0.0
    %s57 = sld [smem:[#allocation2 + $0x3]]
    %v58 = vstv %s57
    %v59 = vmul.f32 %v37, %v58
    %s60 = sld [smem:[#allocation2 + $0x4]]
    %v61 = vstv %s60
    %v62 = vmul.f32 %v39, %v61
    %v63 = vadd.f32 %v59, %v62
    %s64 = sld [smem:[#allocation2 + $0x5]]
    %v65 = vstv %s64
    %v66 = vmul.f32 %v41, %v65
    %v67 = vadd.f32 %v63, %v66
    %s68 = sld [smem:[#allocation2 + $0x13]]
    %v69 = vstv %s68
    %v70 = vadd.f32 %v67, %v69
    %v71 = vmax.f32 %v70, 0.0
    %s72 = sld [smem:[#allocation2 + $0x6]]
    %v73 = vstv %s72
    %v74 = vmul.f32 %v37, %v73
    %s75 = sld [smem:[#allocation2 + $0x7]]
    %v76 = vstv %s75
    %v77 = vmul.f32 %v39, %v76
    %v78 = vadd.f32 %v74, %v77
    %s79 = sld [smem:[#allocation2 + $0x8]]
    %v80 = vstv %s79
    %v81 = vmul.f32 %v41, %v80
    %v82 = vadd.f32 %v78, %v81
    %s83 = sld [smem:[#allocation2 + $0x14]]
    %v84 = vstv %s83
    %v85 = vadd.f32 %v82, %v84
    %v86 = vmax.f32 %v85, 0.0
    %s87 = sld [smem:[#allocation2 + $0x9]]
    %v88 = vstv %s87
    %v89 = vmul.f32 %v37, %v88
    %s90 = sld [smem:[#allocation2 + $0xa]]
    %v91 = vstv %s90
    %v92 = vmul.f32 %v39, %v91
    %v93 = vadd.f32 %v89, %v92
    %s94 = sld [smem:[#allocation2 + $0xb]]
    %v95 = vstv %s94
    %v96 = vmul.f32 %v41, %v95
    %v97 = vadd.f32 %v93, %v96
    %s98 = sld [smem:[#allocation2 + $0x15]]
    %v99 = vstv %s98
    %v100 = vadd.f32 %v97, %v99
    %v101 = vmax.f32 %v100, 0.0
    %s102 = sld [smem:[#allocation2 + $0xc]]
    %v103 = vstv %s102
    %v104 = vmul.f32 %v37, %v103
    %s105 = sld [smem:[#allocation2 + $0xd]]
    %v106 = vstv %s105
    %v107 = vmul.f32 %v39, %v106
    %v108 = vadd.f32 %v104, %v107
    %s109 = sld [smem:[#allocation2 + $0xe]]
    %v110 = vstv %s109
    %v111 = vmul.f32 %v41, %v110
    %v112 = vadd.f32 %v108, %v111
    %s113 = sld [smem:[#allocation2 + $0x16]]
    %v114 = vstv %s113
    %v115 = vadd.f32 %v112, %v114
    %v116 = vmax.f32 %v115, 0.0
    %s117 = sld [smem:[#allocation2 + $0xf]]
    %v118 = vstv %s117
    %v119 = vmul.f32 %v37, %v118
    %s120 = sld [smem:[#allocation2 + $0x10]]
    %v121 = vstv %s120
    %v122 = vmul.f32 %v39, %v121
    %v123 = vadd.f32 %v119, %v122
    %s124 = sld [smem:[#allocation2 + $0x11]]
    %v125 = vstv %s124
    %v126 = vmul.f32 %v41, %v125
    %v127 = vadd.f32 %v123, %v126
    %s128 = sld [smem:[#allocation2 + $0x17]]
    %v129 = vstv %s128
    %v130 = vadd.f32 %v127, %v129
    %v131 = vmax.f32 %v130, 0.0
    %s132 = sld [smem:[#allocation2 + $0x18]]
    %v133 = vstv %s132
    %v134 = vmul.f32 %v56, %v133
    %s135 = sld [smem:[#allocation2 + $0x19]]
    %v136 = vstv %s135
    %v137 = vmul.f32 %v71, %v136
    %v138 = vadd.f32 %v134, %v137
    %s139 = sld [smem:[#allocation2 + $0x1a]]
    %v140 = vstv %s139
    %v141 = vmul.f32 %v86, %v140
    %v142 = vadd.f32 %v138, %v141
    %s143 = sld [smem:[#allocation2 + $0x1b]]
    %v144 = vstv %s143
    %v145 = vmul.f32 %v101, %v144
    %v146 = vadd.f32 %v142, %v145
    %s147 = sld [smem:[#allocation2 + $0x1c]]
    %v148 = vstv %s147
    %v149 = vmul.f32 %v116, %v148
    %v150 = vadd.f32 %v146, %v149
    %s151 = sld [smem:[#allocation2 + $0x1d]]
    %v152 = vstv %s151
    %v153 = vmul.f32 %v131, %v152
    %v154 = vadd.f32 %v150, %v153
    %s155 = sld [smem:[#allocation2 + $0x3c]]
    %v156 = vstv %s155
    %v157 = vadd.f32 %v154, %v156
    %v158 = vmax.f32 %v157, 0.0
    %s159 = sld [smem:[#allocation2 + $0x1e]]
    %v160 = vstv %s159
    %v161 = vmul.f32 %v56, %v160
    %s162 = sld [smem:[#allocation2 + $0x1f]]
    %v163 = vstv %s162
    %v164 = vmul.f32 %v71, %v163
    %v165 = vadd.f32 %v161, %v164
    %s166 = sld [smem:[#allocation2 + $0x20]]
    %v167 = vstv %s166
    %v168 = vmul.f32 %v86, %v167
    %v169 = vadd.f32 %v165, %v168
    %s170 = sld [smem:[#allocation2 + $0x21]]
    %v171 = vstv %s170
    %v172 = vmul.f32 %v101, %v171
    %v173 = vadd.f32 %v169, %v172
    %s174 = sld [smem:[#allocation2 + $0x22]]
    %v175 = vstv %s174
    %v176 = vmul.f32 %v116, %v175
    %v177 = vadd.f32 %v173, %v176
    %s178 = sld [smem:[#allocation2 + $0x23]]
    %v179 = vstv %s178
    %v180 = vmul.f32 %v131, %v179
    %v181 = vadd.f32 %v177, %v180
    %s182 = sld [smem:[#allocation2 + $0x3d]]
    %v183 = vstv %s182
    %v184 = vadd.f32 %v181, %v183
    %v185 = vmax.f32 %v184, 0.0
    %s186 = sld [smem:[#allocation2 + $0x24]]
    %v187 = vstv %s186
    %v188 = vmul.f32 %v56, %v187
    %s189 = sld [smem:[#allocation2 + $0x25]]
    %v190 = vstv %s189
    %v191 = vmul.f32 %v71, %v190
    %v192 = vadd.f32 %v188, %v191
    %s193 = sld [smem:[#allocation2 + $0x26]]
    %v194 = vstv %s193
    %v195 = vmul.f32 %v86, %v194
    %v196 = vadd.f32 %v192, %v195
    %s197 = sld [smem:[#allocation2 + $0x27]]
    %v198 = vstv %s197
    %v199 = vmul.f32 %v101, %v198
    %v200 = vadd.f32 %v196, %v199
    %s201 = sld [smem:[#allocation2 + $0x28]]
    %v202 = vstv %s201
    %v203 = vmul.f32 %v116, %v202
    %v204 = vadd.f32 %v200, %v203
    %s205 = sld [smem:[#allocation2 + $0x29]]
    %v206 = vstv %s205
    %v207 = vmul.f32 %v131, %v206
    %v208 = vadd.f32 %v204, %v207
    %s209 = sld [smem:[#allocation2 + $0x3e]]
    %v210 = vstv %s209
    %v211 = vadd.f32 %v208, %v210
    %v212 = vmax.f32 %v211, 0.0
    %s213 = sld [smem:[#allocation2 + $0x2a]]
    %v214 = vstv %s213
    %v215 = vmul.f32 %v56, %v214
    %s216 = sld [smem:[#allocation2 + $0x2b]]
    %v217 = vstv %s216
    %v218 = vmul.f32 %v71, %v217
    %v219 = vadd.f32 %v215, %v218
    %s220 = sld [smem:[#allocation2 + $0x2c]]
    %v221 = vstv %s220
    %v222 = vmul.f32 %v86, %v221
    %v223 = vadd.f32 %v219, %v222
    %s224 = sld [smem:[#allocation2 + $0x2d]]
    %v225 = vstv %s224
    %v226 = vmul.f32 %v101, %v225
    %v227 = vadd.f32 %v223, %v226
    %s228 = sld [smem:[#allocation2 + $0x2e]]
    %v229 = vstv %s228
    %v230 = vmul.f32 %v116, %v229
    %v231 = vadd.f32 %v227, %v230
    %s232 = sld [smem:[#allocation2 + $0x2f]]
    %v233 = vstv %s232
    %v234 = vmul.f32 %v131, %v233
    %v235 = vadd.f32 %v231, %v234
    %s236 = sld [smem:[#allocation2 + $0x3f]]
    %v237 = vstv %s236
    %v238 = vadd.f32 %v235, %v237
    %v239 = vmax.f32 %v238, 0.0
    %s240 = sld [smem:[#allocation2 + $0x30]]
    %v241 = vstv %s240
    %v242 = vmul.f32 %v56, %v241
    %s243 = sld [smem:[#allocation2 + $0x31]]
    %v244 = vstv %s243
    %v245 = vmul.f32 %v71, %v244
    %v246 = vadd.f32 %v242, %v245
    %s247 = sld [smem:[#allocation2 + $0x32]]
    %v248 = vstv %s247
    %v249 = vmul.f32 %v86, %v248
    %v250 = vadd.f32 %v246, %v249
    %s251 = sld [smem:[#allocation2 + $0x33]]
    %v252 = vstv %s251
    %v253 = vmul.f32 %v101, %v252
    %v254 = vadd.f32 %v250, %v253
    %s255 = sld [smem:[#allocation2 + $0x34]]
    %v256 = vstv %s255
    %v257 = vmul.f32 %v116, %v256
    %v258 = vadd.f32 %v254, %v257
    %s259 = sld [smem:[#allocation2 + $0x35]]
    %v260 = vstv %s259
    %v261 = vmul.f32 %v131, %v260
    %v262 = vadd.f32 %v258, %v261
    %s263 = sld [smem:[#allocation2 + $0x40]]
    %v264 = vstv %s263
    %v265 = vadd.f32 %v262, %v264
    %v266 = vmax.f32 %v265, 0.0
    %s267 = sld [smem:[#allocation2 + $0x36]]
    %v268 = vstv %s267
    %v269 = vmul.f32 %v56, %v268
    %s270 = sld [smem:[#allocation2 + $0x37]]
    %v271 = vstv %s270
    %v272 = vmul.f32 %v71, %v271
    %v273 = vadd.f32 %v269, %v272
    %s274 = sld [smem:[#allocation2 + $0x38]]
    %v275 = vstv %s274
    %v276 = vmul.f32 %v86, %v275
    %v277 = vadd.f32 %v273, %v276
    %s278 = sld [smem:[#allocation2 + $0x39]]
    %v279 = vstv %s278
    %v280 = vmul.f32 %v101, %v279
    %v281 = vadd.f32 %v277, %v280
    %s282 = sld [smem:[#allocation2 + $0x3a]]
    %v283 = vstv %s282
    %v284 = vmul.f32 %v116, %v283
    %v285 = vadd.f32 %v281, %v284
    %s286 = sld [smem:[#allocation2 + $0x3b]]
    %v287 = vstv %s286
    %v288 = vmul.f32 %v131, %v287
    %v289 = vadd.f32 %v285, %v288
    %s290 = sld [smem:[#allocation2 + $0x41]]
    %v291 = vstv %s290
    %v292 = vadd.f32 %v289, %v291
    %v293 = vmax.f32 %v292, 0.0
    %s294 = sld [smem:[#allocation2 + $0x42]]
    %v295 = vstv %s294
    %v296 = vmul.f32 %v158, %v295
    %s297 = sld [smem:[#allocation2 + $0x43]]
    %v298 = vstv %s297
    %v299 = vmul.f32 %v185, %v298
    %v300 = vadd.f32 %v296, %v299
    %s301 = sld [smem:[#allocation2 + $0x44]]
    %v302 = vstv %s301
    %v303 = vmul.f32 %v212, %v302
    %v304 = vadd.f32 %v300, %v303
    %s305 = sld [smem:[#allocation2 + $0x45]]
    %v306 = vstv %s305
    %v307 = vmul.f32 %v239, %v306
    %v308 = vadd.f32 %v304, %v307
    %s309 = sld [smem:[#allocation2 + $0x46]]
    %v310 = vstv %s309
    %v311 = vmul.f32 %v266, %v310
    %v312 = vadd.f32 %v308, %v311
    %s313 = sld [smem:[#allocation2 + $0x47]]
    %v314 = vstv %s313
    %v315 = vmul.f32 %v293, %v314
    %v316 = vadd.f32 %v312, %v315
    %s317 = sld [smem:[#allocation2 + $0x5a]]
    %v318 = vstv %s317
    %v319 = vadd.f32 %v316, %v318
    %s320 = sld [smem:[#allocation2 + $0x48]]
    %v321 = vstv %s320
    %v322 = vmul.f32 %v158, %v321
    %s323 = sld [smem:[#allocation2 + $0x49]]
    %v324 = vstv %s323
    %v325 = vmul.f32 %v185, %v324
    %v326 = vadd.f32 %v322, %v325
    %s327 = sld [smem:[#allocation2 + $0x4a]]
    %v328 = vstv %s327
    %v329 = vmul.f32 %v212, %v328
    %v330 = vadd.f32 %v326, %v329
    %s331 = sld [smem:[#allocation2 + $0x4b]]
    %v332 = vstv %s331
    %v333 = vmul.f32 %v239, %v332
    %v334 = vadd.f32 %v330, %v333
    %s335 = sld [smem:[#allocation2 + $0x4c]]
    %v336 = vstv %s335
    %v337 = vmul.f32 %v266, %v336
    %v338 = vadd.f32 %v334, %v337
    %s339 = sld [smem:[#allocation2 + $0x4d]]
    %v340 = vstv %s339
    %v341 = vmul.f32 %v293, %v340
    %v342 = vadd.f32 %v338, %v341
    %s343 = sld [smem:[#allocation2 + $0x5b]]
    %v344 = vstv %s343
    %v345 = vadd.f32 %v342, %v344
    %s346 = sld [smem:[#allocation2 + $0x4e]]
    %v347 = vstv %s346
    %v348 = vmul.f32 %v158, %v347
    %s349 = sld [smem:[#allocation2 + $0x4f]]
    %v350 = vstv %s349
    %v351 = vmul.f32 %v185, %v350
    %v352 = vadd.f32 %v348, %v351
    %s353 = sld [smem:[#allocation2 + $0x50]]
    %v354 = vstv %s353
    %v355 = vmul.f32 %v212, %v354
    %v356 = vadd.f32 %v352, %v355
    %s357 = sld [smem:[#allocation2 + $0x51]]
    %v358 = vstv %s357
    %v359 = vmul.f32 %v239, %v358
    %v360 = vadd.f32 %v356, %v359
    %s361 = sld [smem:[#allocation2 + $0x52]]
    %v362 = vstv %s361
    %v363 = vmul.f32 %v266, %v362
    %v364 = vadd.f32 %v360, %v363
    %s365 = sld [smem:[#allocation2 + $0x53]]
    %v366 = vstv %s365
    %v367 = vmul.f32 %v293, %v366
    %v368 = vadd.f32 %v364, %v367
    %s369 = sld [smem:[#allocation2 + $0x5c]]
    %v370 = vstv %s369
    %v371 = vadd.f32 %v368, %v370
    %s372 = sld [smem:[#allocation2 + $0x54]]
    %v373 = vstv %s372
    %v374 = vmul.f32 %v158, %v373
    %s375 = sld [smem:[#allocation2 + $0x55]]
    %v376 = vstv %s375
    %v377 = vmul.f32 %v185, %v376
    %v378 = vadd.f32 %v374, %v377
    %s379 = sld [smem:[#allocation2 + $0x56]]
    %v380 = vstv %s379
    %v381 = vmul.f32 %v212, %v380
    %v382 = vadd.f32 %v378, %v381
    %s383 = sld [smem:[#allocation2 + $0x57]]
    %v384 = vstv %s383
    %v385 = vmul.f32 %v239, %v384
    %v386 = vadd.f32 %v382, %v385
    %s387 = sld [smem:[#allocation2 + $0x58]]
    %v388 = vstv %s387
    %v389 = vmul.f32 %v266, %v388
    %v390 = vadd.f32 %v386, %v389
    %s391 = sld [smem:[#allocation2 + $0x59]]
    %v392 = vstv %s391
    %v393 = vmul.f32 %v293, %v392
    %v394 = vadd.f32 %v390, %v393
    %s395 = sld [smem:[#allocation2 + $0x5d]]
    %v396 = vstv %s395
    %v397 = vadd.f32 %v394, %v396
    %398 = vst [vmem:[#allocation7] sm:$0xff] %v319
    %s399 = scalar_lea.vmem [#allocation7], 8
    %400 = vst [vmem:[%s399] sm:$0xff] %v345
    %s401 = scalar_lea.vmem [#allocation7], 16
    %402 = vst [vmem:[%s401] sm:$0xff] %v371
    %s403 = scalar_lea.vmem [#allocation7], 24
    %404 = vst [vmem:[%s403] sm:$0xff] %v397
    // Predicated region
    $region18: #{tpu_custom_call.1} parent=1 // pred_check
      _
    $region19: #{tpu_custom_call.1} parent=1 // pred_check_branch
      %406 = sbr.rel (0) target = $region21
    $region20: #{tpu_custom_call.1} parent=1 // pred_region
      %s408 = ssub.s32 512, 512
      %409 = vsyncadd [#allocation4], %s408
      %s410 = sshll.u32 [#allocation7], 4
      %s411 = int_to_ptr.vmem [resolvable:$true] %s410
      %416 = dma.vmem_to_hbm [thread:$0]  %s411, 512, %s2, [#allocation4], 128, 128, 8
    $region21: #{tpu_custom_call.1} parent=1 // pred_fallthru
      _
    // Predicated region
    $region22: #{tpu_custom_call.1} parent=1 // pred_check
      _
    $region23: #{tpu_custom_call.1} parent=1 // pred_check_branch
      %418 = sbr.rel (0) target = $region25
    $region24: #{tpu_custom_call.1} parent=1 // pred_region
      %419 = dma.done [#allocation4], 512
    $region25: #{tpu_custom_call.1} parent=1 // pred_fallthru
      _
    %420 = vsyncpa [#allocation3], 1
    %421 = vsyncpa [#allocation4], 1
    %422 = vsyncpa [#allocation5], 1

</llo_original>
